<compile_context>
chip_gen: v7x
topology: tpu7x:2x2x1
jax: 0.10.0
libtpu: 0.0.40
codegen_flags: <defaults>
</compile_context>

<pallas_src>
import math
from functools import partial

import jax
import jax.numpy as jnp
from jax.experimental import pallas as pl
from jax.experimental.pallas import tpu as pltpu

INPUT_DIM = 28 * 28
NUM_CLASSES = 10
BN_EPS = 1e-5
LANE = 128


# ---------------------------------------------------------------------------
# Shape derivation (faithful port of MLP.shapes_from_budget_pyramidal)
# ---------------------------------------------------------------------------
def count_parameters(layer_shapes):
    return sum(i * o for i, o in layer_shapes) + sum(o for _, o in layer_shapes)


def shapes_from_sizes(sizes):
    layer_shapes = [[INPUT_DIM, sizes[0]]]
    for in_shp, out_shp in zip(sizes[:-1], sizes[1:]):
        layer_shapes.append([in_shp, out_shp])
    layer_shapes.append([sizes[-1], NUM_CLASSES])
    return layer_shapes


def shapes_from_budget_pyramidal(budget):
    base = 16
    sizes = [base // 2 ** k for k in range(10) if base // 2 ** k >= 16]
    layer_shapes = shapes_from_sizes(sizes)
    assert count_parameters(layer_shapes) <= budget
    while count_parameters(layer_shapes) <= budget:
        base *= 2
        sizes = [base // 2 ** k for k in range(10) if base // 2 ** k >= 16]
        layer_shapes = shapes_from_sizes(sizes)
    base //= 2
    sizes = [base // 2 ** k for k in range(10) if base // 2 ** k >= 16]
    return shapes_from_sizes(sizes)


def _round_up(x, m):
    return ((x + m - 1) // m) * m


def build_layout(layer_shapes):
    """Static (row_offset, K_rows) for each layer's weight inside w_slab.

    Layer 0 keeps its real K = 784 (multiple of 16, so the bf16 static slice
    is free and Mosaic pads lanes internally); later layers use K padded to
    128 because the previous activation already occupies 128 lanes.
    """
    layout = []
    row = 0
    prev_width = INPUT_DIM                       # kernel input width (unpadded)
    for _, fan_out in layer_shapes:
        layout.append((row, prev_width))
        row += prev_width
        prev_width = _round_up(fan_out, LANE)    # activations are lane-dense 128
    return layout, row


# ---------------------------------------------------------------------------
# Pallas kernel: whole MLP forward fused, single grid point, all VMEM-resident
# ---------------------------------------------------------------------------
def _mlp_kernel(layout, num_blocks, x_ref, w_ref, v_ref, o_ref):
    # Flattened f32 input -> bf16 in-kernel (pad/cast fused into the kernel).
    h = x_ref[...].astype(jnp.bfloat16)                    # bf16 [B, 784]
    for i in range(num_blocks):
        r0, k = layout[i]
        w = w_ref[r0:r0 + k, :]                            # static slice (free)
        # Linear on MXU: bf16 operands, f32 accumulation.
        y = jnp.dot(h, w, preferred_element_type=jnp.float32)
        y = y + v_ref[3 * i:3 * i + 1, :]                  # bias (f32)
        # ReLU
        y = jnp.maximum(y, 0.0)
        # BatchNorm1d (training mode: batch mean, biased variance) in f32.
        mu = jnp.mean(y, axis=0, keepdims=True)
        d = y - mu
        var = jnp.mean(d * d, axis=0, keepdims=True)
        gamma = v_ref[3 * i + 1:3 * i + 2, :]
        beta = v_ref[3 * i + 2:3 * i + 3, :]
        # Padded lanes: y==0 -> d==0 -> result 0*rsqrt(eps)*0 + 0 == 0.
        h = (d * jax.lax.rsqrt(var + BN_EPS) * gamma + beta).astype(jnp.bfloat16)

    # Final Linear (no activation / batchnorm); lane-dense [B, 128] store.
    r0, k = layout[num_blocks]
    w = w_ref[r0:r0 + k, :]
    b = v_ref[3 * num_blocks:3 * num_blocks + 1, :]
    o_ref[...] = jnp.dot(h, w, preferred_element_type=jnp.float32) + b


def mlp_forward(x_img, w_slab, v_slab, layer_shapes, layout):
    """x_img: [B, 1, 28, 28] float32 -> logits [B, 10] float32."""
    B = x_img.shape[0]
    num_blocks = len(layer_shapes) - 1

    # Free metadata reshape only; pad/cast happen inside the kernel.
    x = x_img.reshape(B, INPUT_DIM)                        # == torch .view(-1, 784)

    flops = 2 * B * sum(i * o for i, o in layer_shapes)
    transcendentals = B * sum(o for _, o in layer_shapes[:-1])
    bytes_accessed = (x.size * 4 + w_slab.size * 2 + v_slab.size * 4
                      + B * LANE * 4)

    vmem = pl.BlockSpec(memory_space=pltpu.MemorySpace.VMEM)
    out = pl.pallas_call(
        partial(_mlp_kernel, tuple(layout), num_blocks),
        out_shape=jax.ShapeDtypeStruct((B, LANE), jnp.float32),
        in_specs=[vmem, vmem, vmem],
        out_specs=vmem,
        cost_estimate=pl.CostEstimate(
            flops=flops,
            transcendentals=transcendentals,
            bytes_accessed=bytes_accessed,
        ),
    )(x, w_slab, v_slab)
    return out[:, :NUM_CLASSES]


# ---------------------------------------------------------------------------
# Deterministic parameter init (PyTorch Linear default U(-1/sqrt(in), 1/sqrt(in));
# BatchNorm gamma=1, beta=0) and packing into the two VMEM slabs.
# ---------------------------------------------------------------------------
def init_params(layer_shapes, key):
    params = []
    for li, (fan_in, fan_out) in enumerate(layer_shapes):
        key, kw, kb = jax.random.split(key, 3)
        bound = 1.0 / math.sqrt(fan_in)
        w = jax.random.uniform(kw, (fan_in, fan_out), jnp.float32, -bound, bound)
        b = jax.random.uniform(kb, (fan_out,), jnp.float32, -bound, bound)
        if li < len(layer_shapes) - 1:
            params.append((w, b,
                           jnp.ones((fan_out,), jnp.float32),    # gamma
                           jnp.zeros((fan_out,), jnp.float32)))  # beta
        else:
            params.append((w, b))
    return params


def pack_params(layer_shapes, params, layout, total_rows):
    num_blocks = len(layer_shapes) - 1
    w_slab = jnp.zeros((_round_up(total_rows, 16), LANE), jnp.float32)
    v_rows = _round_up(3 * num_blocks + 1, 8)
    v_slab = jnp.zeros((v_rows, LANE), jnp.float32)        # padded gamma/beta stay 0
    for li, p in enumerate(params):
        w, b = p[0], p[1]
        row, _ = layout[li]
        fan_in, fan_out = w.shape
        w_slab = w_slab.at[row:row + fan_in, :fan_out].set(w)
        v_slab = v_slab.at[3 * li, :fan_out].set(b)
        if li < num_blocks:
            v_slab = v_slab.at[3 * li + 1, :fan_out].set(p[2])
            v_slab = v_slab.at[3 * li + 2, :fan_out].set(p[3])
    return w_slab.astype(jnp.bfloat16), v_slab


def check_padded_lane_invariant(layer_shapes, layout, w_slab, v_slab):
    """The kernel relies on padded weight cols / K-rows, biases, gamma, beta
    being exactly zero so BatchNorm keeps lanes fan_out:128 identically zero."""
    num_blocks = len(layer_shapes) - 1
    for li, (fan_in, fan_out) in enumerate(layer_shapes):
        row, k = layout[li]
        assert not bool(jnp.any(w_slab[row:row + k, fan_out:])), \
            f"layer {li}: padded weight columns not zero"
        assert not bool(jnp.any(w_slab[row + fan_in:row + k, :])), \
            f"layer {li}: padded weight K-rows not zero"
        assert not bool(jnp.any(v_slab[3 * li, fan_out:])), \
            f"layer {li}: padded bias lanes not zero"
        if li < num_blocks:
            assert not bool(jnp.any(v_slab[3 * li + 1, fan_out:])), \
                f"layer {li}: padded gamma lanes not zero"
            assert not bool(jnp.any(v_slab[3 * li + 2, fan_out:])), \
                f"layer {li}: padded beta lanes not zero"


# Pure-JAX reference with identical numerics (bf16 matmul operands, f32 acc/BN)
def mlp_reference(x_img, params):
    h = x_img.reshape(x_img.shape[0], INPUT_DIM).astype(jnp.bfloat16)
    for (w, b, g, be) in params[:-1]:
        y = jnp.dot(h, w.astype(jnp.bfloat16),
                    preferred_element_type=jnp.float32) + b
        y = jnp.maximum(y, 0.0)
        mu = jnp.mean(y, axis=0, keepdims=True)
        d = y - mu
        var = jnp.mean(d * d, axis=0, keepdims=True)
        h = (d * jax.lax.rsqrt(var + BN_EPS) * g + be).astype(jnp.bfloat16)
    w, b = params[-1]
    return jnp.dot(h, w.astype(jnp.bfloat16), preferred_element_type=jnp.float32) + b


if __name__ == "__main__":
    # config: shape='pyramidal', parameter_budget=30000, activation='relu'
    layer_shapes = shapes_from_budget_pyramidal(30000)     # [[784,32],[32,16],[16,10]]
    layout, total_rows = build_layout(layer_shapes)        # rows: 0, 784, 912 (1040 total)

    key = jax.random.PRNGKey(0)
    key, kx = jax.random.split(key)
    x = jax.random.normal(kx, (8, 1, 28, 28), jnp.float32)  # NCHW MNIST-like

    params = init_params(layer_shapes, key)
    w_slab, v_slab = pack_params(layer_shapes, params, layout, total_rows)
    check_padded_lane_invariant(layer_shapes, layout, w_slab, v_slab)

    out = mlp_forward(x, w_slab, v_slab, layer_shapes, layout)
    out = jax.block_until_ready(out)

    ref = mlp_reference(x, params)
    assert out.shape == (8, NUM_CLASSES)
    assert jnp.allclose(out, ref, atol=2e-3, rtol=2e-3), "mismatch vs reference"

    print("KERNEL_OK")
</pallas_src>

<mosaic_0001>
module attributes {stable_mosaic.version = 11 : i64} {
  func.func @_mlp_kernel(%arg0: memref<8x784xf32, #tpu.memory_space<vmem>>, %arg1: memref<1040x128xbf16, #tpu.memory_space<vmem>>, %arg2: memref<8x128xf32, #tpu.memory_space<vmem>>, %arg3: memref<8x128xf32, #tpu.memory_space<vmem>>) attributes {dimension_semantics = [], scalar_prefetch = 0 : i64, scratch_operands = 0 : i64, tpu.core_type = #tpu.core_type<tc>} {
    %c0 = arith.constant 0 : index
    %c0_0 = arith.constant 0 : index
    %0 = vector.load %arg0[%c0, %c0_0] : memref<8x784xf32, #tpu.memory_space<vmem>>, vector<8x784xf32>
    %1 = arith.truncf %0 : vector<8x784xf32> to vector<8x784xbf16>
    %c0_1 = arith.constant 0 : index
    %c0_2 = arith.constant 0 : index
    %2 = vector.load %arg1[%c0_1, %c0_2] : memref<1040x128xbf16, #tpu.memory_space<vmem>>, vector<784x128xbf16>
    %cst = arith.constant dense<0.000000e+00> : vector<8x128xf32>
    %3 = tpu.matmul %1, %2, %cst {dimension_numbers = #tpu.dot_dimension_numbers<[1], [0], [0], [1], [0, 0, 1, 1], [], []>} : vector<8x784xbf16>, vector<784x128xbf16>, vector<8x128xf32> -> vector<8x128xf32>
    %c0_3 = arith.constant 0 : index
    %c0_4 = arith.constant 0 : index
    %4 = vector.load %arg2[%c0_3, %c0_4] : memref<8x128xf32, #tpu.memory_space<vmem>>, vector<1x128xf32>
    %5 = vector.broadcast %4 : vector<1x128xf32> to vector<8x128xf32>
    %6 = arith.addf %3, %5 : vector<8x128xf32>
    %cst_5 = arith.constant 0.000000e+00 : f32
    %7 = vector.broadcast %cst_5 : f32 to vector<8x128xf32>
    %8 = arith.maximumf %6, %7 : vector<8x128xf32>
    %cst_6 = arith.constant dense<0.000000e+00> : vector<128xf32>
    %9 = vector.multi_reduction <add>, %8, %cst_6 [0] : vector<8x128xf32> to vector<128xf32>
    %10 = vector.shape_cast %9 : vector<128xf32> to vector<1x128xf32>
    %cst_7 = arith.constant 8.000000e+00 : f32
    %11 = vector.broadcast %cst_7 : f32 to vector<1x128xf32>
    %12 = arith.divf %10, %11 : vector<1x128xf32>
    %13 = vector.broadcast %12 : vector<1x128xf32> to vector<8x128xf32>
    %14 = arith.subf %8, %13 : vector<8x128xf32>
    %15 = arith.mulf %14, %14 : vector<8x128xf32>
    %cst_8 = arith.constant dense<0.000000e+00> : vector<128xf32>
    %16 = vector.multi_reduction <add>, %15, %cst_8 [0] : vector<8x128xf32> to vector<128xf32>
    %17 = vector.shape_cast %16 : vector<128xf32> to vector<1x128xf32>
    %cst_9 = arith.constant 8.000000e+00 : f32
    %18 = vector.broadcast %cst_9 : f32 to vector<1x128xf32>
    %19 = arith.divf %17, %18 : vector<1x128xf32>
    %c1 = arith.constant 1 : index
    %c0_10 = arith.constant 0 : index
    %20 = vector.load %arg2[%c1, %c0_10] : memref<8x128xf32, #tpu.memory_space<vmem>>, vector<1x128xf32>
    %c2 = arith.constant 2 : index
    %c0_11 = arith.constant 0 : index
    %21 = vector.load %arg2[%c2, %c0_11] : memref<8x128xf32, #tpu.memory_space<vmem>>, vector<1x128xf32>
    %cst_12 = arith.constant 9.99999974E-6 : f32
    %22 = vector.broadcast %cst_12 : f32 to vector<1x128xf32>
    %23 = arith.addf %19, %22 : vector<1x128xf32>
    %24 = math.rsqrt %23 : vector<1x128xf32>
    %25 = vector.broadcast %24 : vector<1x128xf32> to vector<8x128xf32>
    %26 = arith.mulf %14, %25 : vector<8x128xf32>
    %27 = vector.broadcast %20 : vector<1x128xf32> to vector<8x128xf32>
    %28 = arith.mulf %26, %27 : vector<8x128xf32>
    %29 = vector.broadcast %21 : vector<1x128xf32> to vector<8x128xf32>
    %30 = arith.addf %28, %29 : vector<8x128xf32>
    %31 = arith.truncf %30 : vector<8x128xf32> to vector<8x128xbf16>
    %c784 = arith.constant 784 : index
    %c0_13 = arith.constant 0 : index
    %32 = vector.load %arg1[%c784, %c0_13] : memref<1040x128xbf16, #tpu.memory_space<vmem>>, vector<128x128xbf16>
    %cst_14 = arith.constant dense<0.000000e+00> : vector<8x128xf32>
    %33 = tpu.matmul %31, %32, %cst_14 {dimension_numbers = #tpu.dot_dimension_numbers<[1], [0], [0], [1], [0, 0, 1, 1], [], []>} : vector<8x128xbf16>, vector<128x128xbf16>, vector<8x128xf32> -> vector<8x128xf32>
    %c3 = arith.constant 3 : index
    %c0_15 = arith.constant 0 : index
    %34 = vector.load %arg2[%c3, %c0_15] : memref<8x128xf32, #tpu.memory_space<vmem>>, vector<1x128xf32>
    %35 = vector.broadcast %34 : vector<1x128xf32> to vector<8x128xf32>
    %36 = arith.addf %33, %35 : vector<8x128xf32>
    %cst_16 = arith.constant 0.000000e+00 : f32
    %37 = vector.broadcast %cst_16 : f32 to vector<8x128xf32>
    %38 = arith.maximumf %36, %37 : vector<8x128xf32>
    %cst_17 = arith.constant dense<0.000000e+00> : vector<128xf32>
    %39 = vector.multi_reduction <add>, %38, %cst_17 [0] : vector<8x128xf32> to vector<128xf32>
    %40 = vector.shape_cast %39 : vector<128xf32> to vector<1x128xf32>
    %cst_18 = arith.constant 8.000000e+00 : f32
    %41 = vector.broadcast %cst_18 : f32 to vector<1x128xf32>
    %42 = arith.divf %40, %41 : vector<1x128xf32>
    %43 = vector.broadcast %42 : vector<1x128xf32> to vector<8x128xf32>
    %44 = arith.subf %38, %43 : vector<8x128xf32>
    %45 = arith.mulf %44, %44 : vector<8x128xf32>
    %cst_19 = arith.constant dense<0.000000e+00> : vector<128xf32>
    %46 = vector.multi_reduction <add>, %45, %cst_19 [0] : vector<8x128xf32> to vector<128xf32>
    %47 = vector.shape_cast %46 : vector<128xf32> to vector<1x128xf32>
    %cst_20 = arith.constant 8.000000e+00 : f32
    %48 = vector.broadcast %cst_20 : f32 to vector<1x128xf32>
    %49 = arith.divf %47, %48 : vector<1x128xf32>
    %c4 = arith.constant 4 : index
    %c0_21 = arith.constant 0 : index
    %50 = vector.load %arg2[%c4, %c0_21] : memref<8x128xf32, #tpu.memory_space<vmem>>, vector<1x128xf32>
    %c5 = arith.constant 5 : index
    %c0_22 = arith.constant 0 : index
    %51 = vector.load %arg2[%c5, %c0_22] : memref<8x128xf32, #tpu.memory_space<vmem>>, vector<1x128xf32>
    %cst_23 = arith.constant 9.99999974E-6 : f32
    %52 = vector.broadcast %cst_23 : f32 to vector<1x128xf32>
    %53 = arith.addf %49, %52 : vector<1x128xf32>
    %54 = math.rsqrt %53 : vector<1x128xf32>
    %55 = vector.broadcast %54 : vector<1x128xf32> to vector<8x128xf32>
    %56 = arith.mulf %44, %55 : vector<8x128xf32>
    %57 = vector.broadcast %50 : vector<1x128xf32> to vector<8x128xf32>
    %58 = arith.mulf %56, %57 : vector<8x128xf32>
    %59 = vector.broadcast %51 : vector<1x128xf32> to vector<8x128xf32>
    %60 = arith.addf %58, %59 : vector<8x128xf32>
    %61 = arith.truncf %60 : vector<8x128xf32> to vector<8x128xbf16>
    %c912 = arith.constant 912 : index
    %c0_24 = arith.constant 0 : index
    %62 = vector.load %arg1[%c912, %c0_24] : memref<1040x128xbf16, #tpu.memory_space<vmem>>, vector<128x128xbf16>
    %c6 = arith.constant 6 : index
    %c0_25 = arith.constant 0 : index
    %63 = vector.load %arg2[%c6, %c0_25] : memref<8x128xf32, #tpu.memory_space<vmem>>, vector<1x128xf32>
    %cst_26 = arith.constant dense<0.000000e+00> : vector<8x128xf32>
    %64 = tpu.matmul %61, %62, %cst_26 {dimension_numbers = #tpu.dot_dimension_numbers<[1], [0], [0], [1], [0, 0, 1, 1], [], []>} : vector<8x128xbf16>, vector<128x128xbf16>, vector<8x128xf32> -> vector<8x128xf32>
    %65 = vector.broadcast %63 : vector<1x128xf32> to vector<8x128xf32>
    %66 = arith.addf %64, %65 : vector<8x128xf32>
    %c0_27 = arith.constant 0 : index
    %c0_28 = arith.constant 0 : index
    %67 = vector.load %arg3[%c0_27, %c0_28] : memref<8x128xf32, #tpu.memory_space<vmem>>, vector<8x128xf32>
    tpu.vector_store %arg3[%c0_27, %c0_28], %66 {strides = array<i32>} : memref<8x128xf32, #tpu.memory_space<vmem>>, vector<8x128xf32>,
    return
  }
}

</mosaic_0001>

<llo_original>
// kernel: tpu_custom_call.1
$region0: #{tpu_custom_call.1}
  #allocation0 [shape = 'u32[]', space=smem, size = 0x4, offset = 0x4, fixed_abs, tag = 'smem constant byte address 0x4 - core index']
  #allocation1 [shape = 'u32[144,128]{1,0:T(1,128)}', space=vmem, size = 0x12000, scoped, tag = 'internal scratch']
  %s0 = inlined_call_operand.hbm [shape: f32[8,784], index: 0, kind: input, shape index: {}]
  %s1 = inlined_call_operand.hbm [shape: bf16[1040,128], index: 1, kind: input, shape index: {}]
  %s2 = inlined_call_operand.hbm [shape: f32[8,128], index: 2, kind: input, shape index: {}]
  %s3 = inlined_call_operand.hbm [shape: f32[8,128], index: 3, kind: output, shape index: {}]
  %s4 = sld [smem:[#allocation0]]
  $region34: #{tpu_custom_call.1} parent=0
    _
  %s6 = ssub.s32 1, %s4
  %s7 = scalar_select 0, %s6, %s4
  $region1: #{tpu_custom_call.1} parent=0
    #allocation2 [shape = 'u8[28672]{0}', space=vmem, size = 0x7000, scoped, tag = 'input window, operand 0, single buffered']
    #allocation3 [shape = 's32[1]{0}', space=sflag, size = 0x4, scoped, tag = 'scoped memory for tpu_custom_call.1']
    #allocation4 [shape = 's32[1]{0}', space=sflag, size = 0x4, scoped, tag = 'scoped memory for tpu_custom_call.1']
    #allocation5 [shape = 'u8[266240]{0}', space=vmem, size = 0x41000, scoped, tag = 'input window, operand 1, single buffered']
    #allocation6 [shape = 's32[1]{0}', space=sflag, size = 0x4, scoped, tag = 'scoped memory for tpu_custom_call.1']
    #allocation7 [shape = 'u8[4096]{0}', space=vmem, size = 0x1000, scoped, tag = 'input window, operand 2, single buffered']
    #allocation8 [shape = 'u8[4096]{0}', space=vmem, size = 0x1000, scoped, tag = 'output window, operand 0, single buffered']
    %8 = vsyncpa [#allocation3], 0
    %9 = vsyncpa [#allocation6], 0
    %10 = vsyncpa [#allocation4], 0
    // Predicated region
    $region2: #{tpu_custom_call.1} parent=1 // pred_check
      _
    $region3: #{tpu_custom_call.1} parent=1 // pred_check_branch
      %12 = sbr.rel (0) target = $region5
    $region4: #{tpu_custom_call.1} parent=1 // pred_region
      %s14 = ssub.s32 896, 896
      %15 = vsyncadd [#allocation3], %s14
      %s17 = sshll.u32 [#allocation2], 4
      %s18 = int_to_ptr.vmem [resolvable:$true] %s17
      %20 = dma.hbm_to_vmem [thread:$0]  %s0, 896, %s18, [#allocation3]
    $region5: #{tpu_custom_call.1} parent=1 // pred_fallthru
      _
    // Predicated region
    $region6: #{tpu_custom_call.1} parent=1 // pred_check
      _
    $region7: #{tpu_custom_call.1} parent=1 // pred_check_branch
      %22 = sbr.rel (0) target = $region9
    $region8: #{tpu_custom_call.1} parent=1 // pred_region
      %s24 = ssub.s32 8320, 8320
      %25 = vsyncadd [#allocation6], %s24
      %s26 = sshll.u32 [#allocation5], 4
      %s27 = int_to_ptr.vmem [resolvable:$true] %s26
      %32 = dma.hbm_to_vmem [thread:$0]  %s1, 8320, %s27, [#allocation6], 64, 64, 4
    $region9: #{tpu_custom_call.1} parent=1 // pred_fallthru
      _
    // Predicated region
    $region10: #{tpu_custom_call.1} parent=1 // pred_check
      _
    $region11: #{tpu_custom_call.1} parent=1 // pred_check_branch
      %34 = sbr.rel (0) target = $region13
    $region12: #{tpu_custom_call.1} parent=1 // pred_region
      %s36 = ssub.s32 128, 128
      %37 = vsyncadd [#allocation6], %s36
      %s39 = sshll.u32 [#allocation7], 4
      %s40 = int_to_ptr.vmem [resolvable:$true] %s39
      %42 = dma.hbm_to_vmem [thread:$0]  %s2, 128, %s40, [#allocation6]
    $region13: #{tpu_custom_call.1} parent=1 // pred_fallthru
      _
    // Predicated region
    $region14: #{tpu_custom_call.1} parent=1 // pred_check
      _
    $region15: #{tpu_custom_call.1} parent=1 // pred_check_branch
      %44 = sbr.rel (0) target = $region17
    $region16: #{tpu_custom_call.1} parent=1 // pred_region
      %45 = dma.done [#allocation3], 896
    $region17: #{tpu_custom_call.1} parent=1 // pred_fallthru
      _
    // Predicated region
    $region18: #{tpu_custom_call.1} parent=1 // pred_check
      _
    $region19: #{tpu_custom_call.1} parent=1 // pred_check_branch
      %47 = sbr.rel (0) target = $region21
    $region20: #{tpu_custom_call.1} parent=1 // pred_region
      %48 = dma.done [#allocation6], 8320
    $region21: #{tpu_custom_call.1} parent=1 // pred_fallthru
      _
    // Predicated region
    $region22: #{tpu_custom_call.1} parent=1 // pred_check
      _
    $region23: #{tpu_custom_call.1} parent=1 // pred_check_branch
      %50 = sbr.rel (0) target = $region25
    $region24: #{tpu_custom_call.1} parent=1 // pred_region
      %51 = dma.done [#allocation6], 128
    $region25: #{tpu_custom_call.1} parent=1 // pred_fallthru
      _
    %v53 = vld [vmem:[#allocation2] sm:$0xff]
    %v54 = vld [vmem:[#allocation2 + $0x8] sm:$0xff]
    %v55 = vld [vmem:[#allocation2 + $0x10] sm:$0xff]
    %v56 = vld [vmem:[#allocation2 + $0x18] sm:$0xff]
    %v57 = vld [vmem:[#allocation2 + $0x20] sm:$0xff]
    %v58 = vld [vmem:[#allocation2 + $0x28] sm:$0xff]
    %v59 = vld [vmem:[#allocation2 + $0x30] sm:$0xff]
    %v60 = vpack.c.bf16 %v53, %v53
    %v61 = vpack.c.bf16 %v54, %v54
    %v62 = vpack.c.bf16 %v55, %v55
    %v63 = vpack.c.bf16 %v56, %v56
    %v64 = vpack.c.bf16 %v57, %v57
    %v65 = vpack.c.bf16 %v58, %v58
    %v66 = vpack.c.bf16 %v59, %v59
    %v67 = vld [vmem:[#allocation5] sm:$0xf]
    %v68 = vld [vmem:[#allocation5 + $0x4] sm:$0xf]
    %v69 = vld [vmem:[#allocation5 + $0x8] sm:$0xf]
    %v70 = vld [vmem:[#allocation5 + $0xc] sm:$0xf]
    %v71 = vld [vmem:[#allocation5 + $0x10] sm:$0xf]
    %v72 = vld [vmem:[#allocation5 + $0x14] sm:$0xf]
    %v73 = vld [vmem:[#allocation5 + $0x18] sm:$0xf]
    %v74 = vld [vmem:[#allocation5 + $0x1c] sm:$0xf]
    %v75 = vld [vmem:[#allocation5 + $0x20] sm:$0xf]
    %v76 = vld [vmem:[#allocation5 + $0x24] sm:$0xf]
    %v77 = vld [vmem:[#allocation5 + $0x28] sm:$0xf]
    %v78 = vld [vmem:[#allocation5 + $0x2c] sm:$0xf]
    %v79 = vld [vmem:[#allocation5 + $0x30] sm:$0xf]
    %v80 = vld [vmem:[#allocation5 + $0x34] sm:$0xf]
    %v81 = vld [vmem:[#allocation5 + $0x38] sm:$0xf]
    %v82 = vld [vmem:[#allocation5 + $0x3c] sm:$0xf]
    %v83 = vld [vmem:[#allocation5 + $0x40] sm:$0xf]
    %v84 = vld [vmem:[#allocation5 + $0x44] sm:$0xf]
    %v85 = vld [vmem:[#allocation5 + $0x48] sm:$0xf]
    %v86 = vld [vmem:[#allocation5 + $0x4c] sm:$0xf]
    %v87 = vld [vmem:[#allocation5 + $0x50] sm:$0xf]
    %v88 = vld [vmem:[#allocation5 + $0x54] sm:$0xf]
    %v89 = vld [vmem:[#allocation5 + $0x58] sm:$0xf]
    %v90 = vld [vmem:[#allocation5 + $0x5c] sm:$0xf]
    %v91 = vld [vmem:[#allocation5 + $0x60] sm:$0xf]
    %v92 = vld [vmem:[#allocation5 + $0x64] sm:$0xf]
    %v93 = vld [vmem:[#allocation5 + $0x68] sm:$0xf]
    %v94 = vld [vmem:[#allocation5 + $0x6c] sm:$0xf]
    %v95 = vld [vmem:[#allocation5 + $0x70] sm:$0xf]
    %v96 = vld [vmem:[#allocation5 + $0x74] sm:$0xf]
    %v97 = vld [vmem:[#allocation5 + $0x78] sm:$0xf]
    %v98 = vld [vmem:[#allocation5 + $0x7c] sm:$0xf]
    %v99 = vld [vmem:[#allocation5 + $0x80] sm:$0xf]
    %v100 = vld [vmem:[#allocation5 + $0x84] sm:$0xf]
    %v101 = vld [vmem:[#allocation5 + $0x88] sm:$0xf]
    %v102 = vld [vmem:[#allocation5 + $0x8c] sm:$0xf]
    %v103 = vld [vmem:[#allocation5 + $0x90] sm:$0xf]
    %v104 = vld [vmem:[#allocation5 + $0x94] sm:$0xf]
    %v105 = vld [vmem:[#allocation5 + $0x98] sm:$0xf]
    %v106 = vld [vmem:[#allocation5 + $0x9c] sm:$0xf]
    %v107 = vld [vmem:[#allocation5 + $0xa0] sm:$0xf]
    %v108 = vld [vmem:[#allocation5 + $0xa4] sm:$0xf]
    %v109 = vld [vmem:[#allocation5 + $0xa8] sm:$0xf]
    %v110 = vld [vmem:[#allocation5 + $0xac] sm:$0xf]
    %v111 = vld [vmem:[#allocation5 + $0xb0] sm:$0xf]
    %v112 = vld [vmem:[#allocation5 + $0xb4] sm:$0xf]
    %v113 = vld [vmem:[#allocation5 + $0xb8] sm:$0xf]
    %v114 = vld [vmem:[#allocation5 + $0xbc] sm:$0xf]
    %v115 = vld [vmem:[#allocation5 + $0xc0] sm:$0xf]
    %v116 = vld [vmem:[#allocation5 + $0xc4] sm:$0xf]
    %v117 = vld [vmem:[#allocation5 + $0xc8] sm:$0xf]
    %v118 = vld [vmem:[#allocation5 + $0xcc] sm:$0xf]
    %v119 = vld [vmem:[#allocation5 + $0xd0] sm:$0xf]
    %v120 = vld [vmem:[#allocation5 + $0xd4] sm:$0xf]
    %v121 = vld [vmem:[#allocation5 + $0xd8] sm:$0xf]
    %v122 = vld [vmem:[#allocation5 + $0xdc] sm:$0xf]
    %v123 = vld [vmem:[#allocation5 + $0xe0] sm:$0xf]
    %v124 = vld [vmem:[#allocation5 + $0xe4] sm:$0xf]
    %v125 = vld [vmem:[#allocation5 + $0xe8] sm:$0xf]
    %v126 = vld [vmem:[#allocation5 + $0xec] sm:$0xf]
    %v127 = vld [vmem:[#allocation5 + $0xf0] sm:$0xf]
    %v128 = vld [vmem:[#allocation5 + $0xf4] sm:$0xf]
    %v129 = vld [vmem:[#allocation5 + $0xf8] sm:$0xf]
    %v130 = vld [vmem:[#allocation5 + $0xfc] sm:$0xf]
    %v131 = vld [vmem:[#allocation5 + $0x100] sm:$0xf]
    %v132 = vld [vmem:[#allocation5 + $0x104] sm:$0xf]
    %v133 = vld [vmem:[#allocation5 + $0x108] sm:$0xf]
    %v134 = vld [vmem:[#allocation5 + $0x10c] sm:$0xf]
    %v135 = vld [vmem:[#allocation5 + $0x110] sm:$0xf]
    %v136 = vld [vmem:[#allocation5 + $0x114] sm:$0xf]
    %v137 = vld [vmem:[#allocation5 + $0x118] sm:$0xf]
    %v138 = vld [vmem:[#allocation5 + $0x11c] sm:$0xf]
    %v139 = vld [vmem:[#allocation5 + $0x120] sm:$0xf]
    %v140 = vld [vmem:[#allocation5 + $0x124] sm:$0xf]
    %v141 = vld [vmem:[#allocation5 + $0x128] sm:$0xf]
    %v142 = vld [vmem:[#allocation5 + $0x12c] sm:$0xf]
    %v143 = vld [vmem:[#allocation5 + $0x130] sm:$0xf]
    %v144 = vld [vmem:[#allocation5 + $0x134] sm:$0xf]
    %v145 = vld [vmem:[#allocation5 + $0x138] sm:$0xf]
    %v146 = vld [vmem:[#allocation5 + $0x13c] sm:$0xf]
    %v147 = vld [vmem:[#allocation5 + $0x140] sm:$0xf]
    %v148 = vld [vmem:[#allocation5 + $0x144] sm:$0xf]
    %v149 = vld [vmem:[#allocation5 + $0x148] sm:$0xf]
    %v150 = vld [vmem:[#allocation5 + $0x14c] sm:$0xf]
    %v151 = vld [vmem:[#allocation5 + $0x150] sm:$0xf]
    %v152 = vld [vmem:[#allocation5 + $0x154] sm:$0xf]
    %v153 = vld [vmem:[#allocation5 + $0x158] sm:$0xf]
    %v154 = vld [vmem:[#allocation5 + $0x15c] sm:$0xf]
    %v155 = vld [vmem:[#allocation5 + $0x160] sm:$0xf]
    %v156 = vld [vmem:[#allocation5 + $0x164] sm:$0xf]
    %v157 = vld [vmem:[#allocation5 + $0x168] sm:$0xf]
    %v158 = vld [vmem:[#allocation5 + $0x16c] sm:$0xf]
    %v159 = vld [vmem:[#allocation5 + $0x170] sm:$0xf]
    %v160 = vld [vmem:[#allocation5 + $0x174] sm:$0xf]
    %v161 = vld [vmem:[#allocation5 + $0x178] sm:$0xf]
    %v162 = vld [vmem:[#allocation5 + $0x17c] sm:$0xf]
    %v163 = vld [vmem:[#allocation5 + $0x180] sm:$0xf]
    %v164 = vld [vmem:[#allocation5 + $0x184] sm:$0xf]
    %v165 = vld [vmem:[#allocation7] sm:$0x1]
    %v166 = vlaneseq
    %v167 = vshrl.u32 %v166, 7
    %v168 = vsub.s32 0, %v167
    %v169 = vrot.slane %v165, %v168
    %v268 = vunpack.c.l.b16 %v67
    %v269 = vunpack.c.l.b16 %v68
    %v270 = vunpack.c.l.b16 %v69
    %v271 = vunpack.c.l.b16 %v70
    %v272 = vunpack.c.l.b16 %v71
    %v273 = vunpack.c.l.b16 %v72
    %v274 = vunpack.c.l.b16 %v73
    %v275 = vunpack.c.l.b16 %v74
    %v276 = vunpack.c.l.b16 %v75
    %v277 = vunpack.c.l.b16 %v76
    %v278 = vunpack.c.l.b16 %v77
    %v279 = vunpack.c.l.b16 %v78
    %v280 = vunpack.c.l.b16 %v79
    %v281 = vunpack.c.l.b16 %v80
    %v282 = vunpack.c.l.b16 %v81
    %v283 = vunpack.c.l.b16 %v82
    %v284 = vunpack.c.l.b16 %v83
    %v285 = vunpack.c.l.b16 %v84
    %v286 = vunpack.c.l.b16 %v85
    %v287 = vunpack.c.l.b16 %v86
    %v288 = vunpack.c.l.b16 %v87
    %v289 = vunpack.c.l.b16 %v88
    %v290 = vunpack.c.l.b16 %v89
    %v291 = vunpack.c.l.b16 %v90
    %v292 = vunpack.c.l.b16 %v91
    %v293 = vunpack.c.l.b16 %v92
    %v294 = vunpack.c.l.b16 %v93
    %v295 = vunpack.c.l.b16 %v94
    %v296 = vunpack.c.l.b16 %v95
    %v297 = vunpack.c.l.b16 %v96
    %v298 = vunpack.c.l.b16 %v97
    %v299 = vunpack.c.l.b16 %v98
    %v300 = vunpack.c.l.b16 %v99
    %v301 = vunpack.c.l.b16 %v100
    %v302 = vunpack.c.l.b16 %v101
    %v303 = vunpack.c.l.b16 %v102
    %v304 = vunpack.c.l.b16 %v103
    %v305 = vunpack.c.l.b16 %v104
    %v306 = vunpack.c.l.b16 %v105
    %v307 = vunpack.c.l.b16 %v106
    %v308 = vunpack.c.l.b16 %v107
    %v309 = vunpack.c.l.b16 %v108
    %v310 = vunpack.c.l.b16 %v109
    %v311 = vunpack.c.l.b16 %v110
    %v312 = vunpack.c.l.b16 %v111
    %v313 = vunpack.c.l.b16 %v112
    %v314 = vunpack.c.l.b16 %v113
    %v315 = vunpack.c.l.b16 %v114
    %v316 = vunpack.c.l.b16 %v115
    %v317 = vunpack.c.l.b16 %v116
    %v318 = vunpack.c.l.b16 %v117
    %v319 = vunpack.c.l.b16 %v118
    %v320 = vunpack.c.l.b16 %v119
    %v321 = vunpack.c.l.b16 %v120
    %v322 = vunpack.c.l.b16 %v121
    %v323 = vunpack.c.l.b16 %v122
    %v324 = vunpack.c.l.b16 %v123
    %v325 = vunpack.c.l.b16 %v124
    %v326 = vunpack.c.l.b16 %v125
    %v327 = vunpack.c.l.b16 %v126
    %v328 = vunpack.c.l.b16 %v127
    %v329 = vunpack.c.l.b16 %v128
    %v330 = vunpack.c.l.b16 %v129
    %v331 = vunpack.c.l.b16 %v130
    %v332 = vunpack.c.l.b16 %v131
    %v333 = vunpack.c.l.b16 %v132
    %v334 = vunpack.c.l.b16 %v133
    %v335 = vunpack.c.l.b16 %v134
    %v336 = vunpack.c.l.b16 %v135
    %v337 = vunpack.c.l.b16 %v136
    %v338 = vunpack.c.l.b16 %v137
    %v339 = vunpack.c.l.b16 %v138
    %v340 = vunpack.c.l.b16 %v139
    %v341 = vunpack.c.l.b16 %v140
    %v342 = vunpack.c.l.b16 %v141
    %v343 = vunpack.c.l.b16 %v142
    %v344 = vunpack.c.l.b16 %v143
    %v345 = vunpack.c.l.b16 %v144
    %v346 = vunpack.c.l.b16 %v145
    %v347 = vunpack.c.l.b16 %v146
    %v348 = vunpack.c.l.b16 %v147
    %v349 = vunpack.c.l.b16 %v148
    %v350 = vunpack.c.l.b16 %v149
    %v351 = vunpack.c.l.b16 %v150
    %v352 = vunpack.c.l.b16 %v151
    %v353 = vunpack.c.l.b16 %v152
    %v354 = vunpack.c.l.b16 %v153
    %v355 = vunpack.c.l.b16 %v154
    %v356 = vunpack.c.l.b16 %v155
    %v357 = vunpack.c.l.b16 %v156
    %v358 = vunpack.c.l.b16 %v157
    %v359 = vunpack.c.l.b16 %v158
    %v360 = vunpack.c.l.b16 %v159
    %v361 = vunpack.c.l.b16 %v160
    %v362 = vunpack.c.l.b16 %v161
    %v363 = vunpack.c.l.b16 %v162
    %v364 = vunpack.c.l.b16 %v163
    %v365 = vunpack.c.l.b16 %v164
    %v366 = vpack.c.b16 %v269, %v268
    %v367 = vpack.c.b16 %v271, %v270
    %v368 = vpack.c.b16 %v273, %v272
    %v369 = vpack.c.b16 %v275, %v274
    %v370 = vpack.c.b16 %v277, %v276
    %v371 = vpack.c.b16 %v279, %v278
    %v372 = vpack.c.b16 %v281, %v280
    %v373 = vpack.c.b16 %v283, %v282
    %v374 = vpack.c.b16 %v285, %v284
    %v375 = vpack.c.b16 %v287, %v286
    %v376 = vpack.c.b16 %v289, %v288
    %v377 = vpack.c.b16 %v291, %v290
    %v378 = vpack.c.b16 %v293, %v292
    %v379 = vpack.c.b16 %v295, %v294
    %v380 = vpack.c.b16 %v297, %v296
    %v381 = vpack.c.b16 %v299, %v298
    %v382 = vpack.c.b16 %v301, %v300
    %v383 = vpack.c.b16 %v303, %v302
    %v384 = vpack.c.b16 %v305, %v304
    %v385 = vpack.c.b16 %v307, %v306
    %v386 = vpack.c.b16 %v309, %v308
    %v387 = vpack.c.b16 %v311, %v310
    %v388 = vpack.c.b16 %v313, %v312
    %v389 = vpack.c.b16 %v315, %v314
    %v390 = vpack.c.b16 %v317, %v316
    %v391 = vpack.c.b16 %v319, %v318
    %v392 = vpack.c.b16 %v321, %v320
    %v393 = vpack.c.b16 %v323, %v322
    %v394 = vpack.c.b16 %v325, %v324
    %v395 = vpack.c.b16 %v327, %v326
    %v396 = vpack.c.b16 %v329, %v328
    %v397 = vpack.c.b16 %v331, %v330
    %v398 = vpack.c.b16 %v333, %v332
    %v399 = vpack.c.b16 %v335, %v334
    %v400 = vpack.c.b16 %v337, %v336
    %v401 = vpack.c.b16 %v339, %v338
    %v402 = vpack.c.b16 %v341, %v340
    %v403 = vpack.c.b16 %v343, %v342
    %v404 = vpack.c.b16 %v345, %v344
    %v405 = vpack.c.b16 %v347, %v346
    %v406 = vpack.c.b16 %v349, %v348
    %v407 = vpack.c.b16 %v351, %v350
    %v408 = vpack.c.b16 %v353, %v352
    %v409 = vpack.c.b16 %v355, %v354
    %v410 = vpack.c.b16 %v357, %v356
    %v411 = vpack.c.b16 %v359, %v358
    %v412 = vpack.c.b16 %v361, %v360
    %v413 = vpack.c.b16 %v363, %v362
    %v414 = vpack.c.b16 %v365, %v364
    %vm464 = vcmask 130048
    %v466 = vsel %vm464, %v66, 0
    %468 = vmatprep.subr.bf16.mxu0 0
    %469 = vmatpush1.bf16.msra.mxu0 %v366
    %470 = vmatprep.subr.bf16.mxu0 0
    %471 = vmatpush1.bf16.msra.mxu0 %v367
    %472 = vmatprep.subr.bf16.mxu0 0
    %473 = vmatpush1.bf16.msra.mxu0 %v368
    %474 = vmatprep.subr.bf16.mxu0 0
    %475 = vmatpush1.bf16.msra.mxu0 %v369
    %476 = vmatprep.subr.bf16.mxu0 0
    %477 = vmatpush1.bf16.msra.mxu0 %v370
    %478 = vmatprep.subr.bf16.mxu0 0
    %479 = vmatpush1.bf16.msra.mxu0 %v371
    %480 = vmatprep.subr.bf16.mxu0 0
    %481 = vmatpush1.bf16.msra.mxu0 %v372
    %482 = vmatprep.subr.bf16.mxu0 0
    %483 = vmatpush1.bf16.msra.mxu0 %v373
    %484 = vmatprep.subr.bf16.mxu0 0
    %485 = vmatpush1.bf16.msra.mxu0 %v374
    %486 = vmatprep.subr.bf16.mxu0 0
    %487 = vmatpush1.bf16.msra.mxu0 %v375
    %488 = vmatprep.subr.bf16.mxu0 0
    %489 = vmatpush1.bf16.msra.mxu0 %v376
    %490 = vmatprep.subr.bf16.mxu0 0
    %491 = vmatpush1.bf16.msra.mxu0 %v377
    %492 = vmatprep.subr.bf16.mxu0 0
    %493 = vmatpush1.bf16.msra.mxu0 %v378
    %494 = vmatprep.subr.bf16.mxu0 0
    %495 = vmatpush1.bf16.msra.mxu0 %v379
    %496 = vmatprep.subr.bf16.mxu0 0
    %497 = vmatpush1.bf16.msra.mxu0 %v380
    %498 = vmatprep.subr.bf16.mxu0 0
    %499 = vmatpush1.bf16.msra.mxu0 %v381
    %500 = vmatprep.mubr.bf16.mxu0 %v61
    %501 = vmatmul.mubr.bf16.gmra.mrb[0].mxu0 %v60
    %v502 = vpop.f32.mrb[0].mxu0
    %v503 = vadd.f32 %v169, %v502
    %v504 = vpop.f32.mrb[0].mxu0
    %v505 = vpop.f32.mrb[0].mxu0
    %v506 = vpop.f32.mrb[0].mxu0
    %507 = vdwg.mxu0
    %508 = vmatprep.subr.bf16.mxu0 0
    %509 = vmatpush1.bf16.msra.mxu0 %v382
    %510 = vmatprep.subr.bf16.mxu0 0
    %511 = vmatpush1.bf16.msra.mxu0 %v383
    %512 = vmatprep.subr.bf16.mxu0 0
    %513 = vmatpush1.bf16.msra.mxu0 %v384
    %514 = vmatprep.subr.bf16.mxu0 0
    %515 = vmatpush1.bf16.msra.mxu0 %v385
    %516 = vmatprep.subr.bf16.mxu0 0
    %517 = vmatpush1.bf16.msra.mxu0 %v386
    %518 = vmatprep.subr.bf16.mxu0 0
    %519 = vmatpush1.bf16.msra.mxu0 %v387
    %520 = vmatprep.subr.bf16.mxu0 0
    %521 = vmatpush1.bf16.msra.mxu0 %v388
    %522 = vmatprep.subr.bf16.mxu0 0
    %523 = vmatpush1.bf16.msra.mxu0 %v389
    %524 = vmatprep.subr.bf16.mxu0 0
    %525 = vmatpush1.bf16.msra.mxu0 %v390
    %526 = vmatprep.subr.bf16.mxu0 0
    %527 = vmatpush1.bf16.msra.mxu0 %v391
    %528 = vmatprep.subr.bf16.mxu0 0
    %529 = vmatpush1.bf16.msra.mxu0 %v392
    %530 = vmatprep.subr.bf16.mxu0 0
    %531 = vmatpush1.bf16.msra.mxu0 %v393
    %532 = vmatprep.subr.bf16.mxu0 0
    %533 = vmatpush1.bf16.msra.mxu0 %v394
    %534 = vmatprep.subr.bf16.mxu0 0
    %535 = vmatpush1.bf16.msra.mxu0 %v395
    %536 = vmatprep.subr.bf16.mxu0 0
    %537 = vmatpush1.bf16.msra.mxu0 %v396
    %538 = vmatprep.subr.bf16.mxu0 0
    %539 = vmatpush1.bf16.msra.mxu0 %v397
    %540 = vmatprep.mubr.bf16.mxu0 %v63
    %541 = vmatmul.mubr.bf16.gmra.mrb[0].mxu0 %v62
    %v542 = vpop.f32.mrb[0].mxu0
    %v543 = vadd.f32 %v503, %v542
    %v544 = vpop.f32.mrb[0].mxu0
    %v545 = vpop.f32.mrb[0].mxu0
    %v546 = vpop.f32.mrb[0].mxu0
    %547 = vdwg.mxu0
    %548 = vmatprep.subr.bf16.mxu0 0
    %549 = vmatpush1.bf16.msra.mxu0 %v398
    %550 = vmatprep.subr.bf16.mxu0 0
    %551 = vmatpush1.bf16.msra.mxu0 %v399
    %552 = vmatprep.subr.bf16.mxu0 0
    %553 = vmatpush1.bf16.msra.mxu0 %v400
    %554 = vmatprep.subr.bf16.mxu0 0
    %555 = vmatpush1.bf16.msra.mxu0 %v401
    %556 = vmatprep.subr.bf16.mxu0 0
    %557 = vmatpush1.bf16.msra.mxu0 %v402
    %558 = vmatprep.subr.bf16.mxu0 0
    %559 = vmatpush1.bf16.msra.mxu0 %v403
    %560 = vmatprep.subr.bf16.mxu0 0
    %561 = vmatpush1.bf16.msra.mxu0 %v404
    %562 = vmatprep.subr.bf16.mxu0 0
    %563 = vmatpush1.bf16.msra.mxu0 %v405
    %564 = vmatprep.subr.bf16.mxu0 0
    %565 = vmatpush1.bf16.msra.mxu0 %v406
    %566 = vmatprep.subr.bf16.mxu0 0
    %567 = vmatpush1.bf16.msra.mxu0 %v407
    %568 = vmatprep.subr.bf16.mxu0 0
    %569 = vmatpush1.bf16.msra.mxu0 %v408
    %570 = vmatprep.subr.bf16.mxu0 0
    %571 = vmatpush1.bf16.msra.mxu0 %v409
    %572 = vmatprep.subr.bf16.mxu0 0
    %573 = vmatpush1.bf16.msra.mxu0 %v410
    %574 = vmatprep.subr.bf16.mxu0 0
    %575 = vmatpush1.bf16.msra.mxu0 %v411
    %576 = vmatprep.subr.bf16.mxu0 0
    %577 = vmatpush1.bf16.msra.mxu0 %v412
    %578 = vmatprep.subr.bf16.mxu0 0
    %579 = vmatpush1.bf16.msra.mxu0 %v413
    %580 = vmatprep.mubr.bf16.mxu0 %v65
    %581 = vmatmul.mubr.bf16.gmra.mrb[0].mxu0 %v64
    %v582 = vpop.f32.mrb[0].mxu0
    %v583 = vadd.f32 %v543, %v582
    %v584 = vpop.f32.mrb[0].mxu0
    %v585 = vpop.f32.mrb[0].mxu0
    %v586 = vpop.f32.mrb[0].mxu0
    %587 = vdwg.mxu0
    %588 = vmatprep.subr.bf16.mxu0 0
    %589 = vmatpush1.bf16.msra.mxu0 %v414
    %590 = vmatprep.subr.bf16.mxu0 0
    %591 = vmatpush1.bf16.msra.mxu0 0
    %592 = vmatprep.subr.bf16.mxu0 0
    %593 = vmatpush1.bf16.msra.mxu0 0
    %594 = vmatprep.subr.bf16.mxu0 0
    %595 = vmatpush1.bf16.msra.mxu0 0
    %596 = vmatprep.subr.bf16.mxu0 0
    %597 = vmatpush1.bf16.msra.mxu0 0
    %598 = vmatprep.subr.bf16.mxu0 0
    %599 = vmatpush1.bf16.msra.mxu0 0
    %600 = vmatprep.subr.bf16.mxu0 0
    %601 = vmatpush1.bf16.msra.mxu0 0
    %602 = vmatprep.subr.bf16.mxu0 0
    %603 = vmatpush1.bf16.msra.mxu0 0
    %604 = vmatprep.subr.bf16.mxu0 0
    %605 = vmatpush1.bf16.msra.mxu0 0
    %606 = vmatprep.subr.bf16.mxu0 0
    %607 = vmatpush1.bf16.msra.mxu0 0
    %608 = vmatprep.subr.bf16.mxu0 0
    %609 = vmatpush1.bf16.msra.mxu0 0
    %610 = vmatprep.subr.bf16.mxu0 0
    %611 = vmatpush1.bf16.msra.mxu0 0
    %612 = vmatprep.subr.bf16.mxu0 0
    %613 = vmatpush1.bf16.msra.mxu0 0
    %614 = vmatprep.subr.bf16.mxu0 0
    %615 = vmatpush1.bf16.msra.mxu0 0
    %616 = vmatprep.subr.bf16.mxu0 0
    %617 = vmatpush1.bf16.msra.mxu0 0
    %618 = vmatprep.subr.bf16.mxu0 0
    %619 = vmatpush1.bf16.msra.mxu0 0
    %620 = vmatprep.mubr.bf16.mxu0 0
    %621 = vmatmul.mubr.bf16.gmra.mrb[0].mxu0 %v466
    %v622 = vpop.f32.mrb[0].mxu0
    %v623 = vadd.f32 %v583, %v622
    %v624 = vpop.f32.mrb[0].mxu0
    %v625 = vpop.f32.mrb[0].mxu0
    %v626 = vpop.f32.mrb[0].mxu0
    %627 = vdwg.mxu0
    %v628 = vmax.f32 %v623, 0.0
    %v629 = vrot.slane %v628, 4
    %v630 = vadd.f32 %v628, %v629
    %v631 = vrot.slane %v630, 2
    %v632 = vadd.f32 %v630, %v631
    %v633 = vrot.slane %v632, 1
    %v634 = vadd.f32 %v632, %v633
    %v635 = vrcp.pop 8.0
    %v636 = vmul.f32 %v634, %v635
    %v637 = vsub.f32 %v628, %v636
    %v638 = vmul.f32 %v637, %v637
    %v639 = vrot.slane %v638, 4
    %v640 = vadd.f32 %v638, %v639
    %v641 = vrot.slane %v640, 2
    %v642 = vadd.f32 %v640, %v641
    %v643 = vrot.slane %v642, 1
    %v644 = vadd.f32 %v642, %v643
    %v645 = vmul.f32 %v644, %v635
    %v646 = vld [vmem:[#allocation7 + $0x1] sm:$0x1]
    %v647 = vld [vmem:[#allocation7 + $0x2] sm:$0x1]
    %v648 = vadd.f32 %v645, 1e-05
    %v649 = vrsqrt.pop %v648
    %v650 = vmul.f32 %v637, %v649
    %v651 = vlaneseq
    %v652 = vshrl.u32 %v651, 7
    %v653 = vsub.s32 0, %v652
    %v654 = vrot.slane %v646, %v653
    %v655 = vmul.f32 %v650, %v654
    %v656 = vlaneseq
    %v657 = vshrl.u32 %v656, 7
    %v658 = vsub.s32 0, %v657
    %v659 = vrot.slane %v647, %v658
    %v660 = vadd.f32 %v655, %v659
    %v661 = vpack.c.bf16 %v660, %v660
    %v662 = vld [vmem:[#allocation5 + $0x188] sm:$0xf]
    %v663 = vld [vmem:[#allocation5 + $0x18c] sm:$0xf]
    %v664 = vld [vmem:[#allocation5 + $0x190] sm:$0xf]
    %v665 = vld [vmem:[#allocation5 + $0x194] sm:$0xf]
    %v666 = vld [vmem:[#allocation5 + $0x198] sm:$0xf]
    %v667 = vld [vmem:[#allocation5 + $0x19c] sm:$0xf]
    %v668 = vld [vmem:[#allocation5 + $0x1a0] sm:$0xf]
    %v669 = vld [vmem:[#allocation5 + $0x1a4] sm:$0xf]
    %v670 = vld [vmem:[#allocation5 + $0x1a8] sm:$0xf]
    %v671 = vld [vmem:[#allocation5 + $0x1ac] sm:$0xf]
    %v672 = vld [vmem:[#allocation5 + $0x1b0] sm:$0xf]
    %v673 = vld [vmem:[#allocation5 + $0x1b4] sm:$0xf]
    %v674 = vld [vmem:[#allocation5 + $0x1b8] sm:$0xf]
    %v675 = vld [vmem:[#allocation5 + $0x1bc] sm:$0xf]
    %v676 = vld [vmem:[#allocation5 + $0x1c0] sm:$0xf]
    %v677 = vld [vmem:[#allocation5 + $0x1c4] sm:$0xf]
    %v678 = vld [vmem:[#allocation7 + $0x3] sm:$0x1]
    %v679 = vlaneseq
    %v680 = vshrl.u32 %v679, 7
    %v681 = vsub.s32 0, %v680
    %v682 = vrot.slane %v678, %v681
    %v699 = vunpack.c.l.b16 %v662
    %v700 = vunpack.c.l.b16 %v663
    %v701 = vunpack.c.l.b16 %v664
    %v702 = vunpack.c.l.b16 %v665
    %v703 = vunpack.c.l.b16 %v666
    %v704 = vunpack.c.l.b16 %v667
    %v705 = vunpack.c.l.b16 %v668
    %v706 = vunpack.c.l.b16 %v669
    %v707 = vunpack.c.l.b16 %v670
    %v708 = vunpack.c.l.b16 %v671
    %v709 = vunpack.c.l.b16 %v672
    %v710 = vunpack.c.l.b16 %v673
    %v711 = vunpack.c.l.b16 %v674
    %v712 = vunpack.c.l.b16 %v675
    %v713 = vunpack.c.l.b16 %v676
    %v714 = vunpack.c.l.b16 %v677
    %v715 = vpack.c.b16 %v700, %v699
    %v716 = vpack.c.b16 %v702, %v701
    %v717 = vpack.c.b16 %v704, %v703
    %v718 = vpack.c.b16 %v706, %v705
    %v719 = vpack.c.b16 %v708, %v707
    %v720 = vpack.c.b16 %v710, %v709
    %v721 = vpack.c.b16 %v712, %v711
    %v722 = vpack.c.b16 %v714, %v713
    %731 = vmatprep.subr.bf16.mxu0 0
    %732 = vmatpush1.bf16.msra.mxu0 %v715
    %733 = vmatprep.subr.bf16.mxu0 0
    %734 = vmatpush1.bf16.msra.mxu0 %v716
    %735 = vmatprep.subr.bf16.mxu0 0
    %736 = vmatpush1.bf16.msra.mxu0 %v717
    %737 = vmatprep.subr.bf16.mxu0 0
    %738 = vmatpush1.bf16.msra.mxu0 %v718
    %739 = vmatprep.subr.bf16.mxu0 0
    %740 = vmatpush1.bf16.msra.mxu0 %v719
    %741 = vmatprep.subr.bf16.mxu0 0
    %742 = vmatpush1.bf16.msra.mxu0 %v720
    %743 = vmatprep.subr.bf16.mxu0 0
    %744 = vmatpush1.bf16.msra.mxu0 %v721
    %745 = vmatprep.subr.bf16.mxu0 0
    %746 = vmatpush1.bf16.msra.mxu0 %v722
    %747 = vmatprep.subr.bf16.mxu0 0
    %748 = vmatpush1.bf16.msra.mxu0 0
    %749 = vmatprep.subr.bf16.mxu0 0
    %750 = vmatpush1.bf16.msra.mxu0 0
    %751 = vmatprep.subr.bf16.mxu0 0
    %752 = vmatpush1.bf16.msra.mxu0 0
    %753 = vmatprep.subr.bf16.mxu0 0
    %754 = vmatpush1.bf16.msra.mxu0 0
    %755 = vmatprep.subr.bf16.mxu0 0
    %756 = vmatpush1.bf16.msra.mxu0 0
    %757 = vmatprep.subr.bf16.mxu0 0
    %758 = vmatpush1.bf16.msra.mxu0 0
    %759 = vmatprep.subr.bf16.mxu0 0
    %760 = vmatpush1.bf16.msra.mxu0 0
    %761 = vmatprep.subr.bf16.mxu0 0
    %762 = vmatpush1.bf16.msra.mxu0 0
    %763 = vmatprep.mubr.bf16.mxu0 0
    %764 = vmatmul.mubr.bf16.gmra.mrb[0].mxu0 %v661
    %v765 = vpop.f32.mrb[0].mxu0
    %v766 = vadd.f32 %v682, %v765
    %v767 = vpop.f32.mrb[0].mxu0
    %v768 = vpop.f32.mrb[0].mxu0
    %v769 = vpop.f32.mrb[0].mxu0
    %770 = vdwg.mxu0
    %v771 = vmax.f32 %v766, 0.0
    %v772 = vrot.slane %v771, 4
    %v773 = vadd.f32 %v771, %v772
    %v774 = vrot.slane %v773, 2
    %v775 = vadd.f32 %v773, %v774
    %v776 = vrot.slane %v775, 1
    %v777 = vadd.f32 %v775, %v776
    %v778 = vmul.f32 %v777, %v635
    %v779 = vsub.f32 %v771, %v778
    %v780 = vmul.f32 %v779, %v779
    %v781 = vrot.slane %v780, 4
    %v782 = vadd.f32 %v780, %v781
    %v783 = vrot.slane %v782, 2
    %v784 = vadd.f32 %v782, %v783
    %v785 = vrot.slane %v784, 1
    %v786 = vadd.f32 %v784, %v785
    %v787 = vmul.f32 %v786, %v635
    %v788 = vld [vmem:[#allocation7 + $0x4] sm:$0x1]
    %v789 = vld [vmem:[#allocation7 + $0x5] sm:$0x1]
    %v790 = vadd.f32 %v787, 1e-05
    %v791 = vrsqrt.pop %v790
    %v792 = vmul.f32 %v779, %v791
    %v793 = vlaneseq
    %v794 = vshrl.u32 %v793, 7
    %v795 = vsub.s32 0, %v794
    %v796 = vrot.slane %v788, %v795
    %v797 = vmul.f32 %v792, %v796
    %v798 = vlaneseq
    %v799 = vshrl.u32 %v798, 7
    %v800 = vsub.s32 0, %v799
    %v801 = vrot.slane %v789, %v800
    %v802 = vadd.f32 %v797, %v801
    %v803 = vpack.c.bf16 %v802, %v802
    %v804 = vld [vmem:[#allocation5 + $0x1c8] sm:$0xf]
    %v805 = vld [vmem:[#allocation5 + $0x1cc] sm:$0xf]
    %v806 = vld [vmem:[#allocation5 + $0x1d0] sm:$0xf]
    %v807 = vld [vmem:[#allocation5 + $0x1d4] sm:$0xf]
    %v808 = vld [vmem:[#allocation5 + $0x1d8] sm:$0xf]
    %v809 = vld [vmem:[#allocation5 + $0x1dc] sm:$0xf]
    %v810 = vld [vmem:[#allocation5 + $0x1e0] sm:$0xf]
    %v811 = vld [vmem:[#allocation5 + $0x1e4] sm:$0xf]
    %v812 = vld [vmem:[#allocation5 + $0x1e8] sm:$0xf]
    %v813 = vld [vmem:[#allocation5 + $0x1ec] sm:$0xf]
    %v814 = vld [vmem:[#allocation5 + $0x1f0] sm:$0xf]
    %v815 = vld [vmem:[#allocation5 + $0x1f4] sm:$0xf]
    %v816 = vld [vmem:[#allocation5 + $0x1f8] sm:$0xf]
    %v817 = vld [vmem:[#allocation5 + $0x1fc] sm:$0xf]
    %v818 = vld [vmem:[#allocation5 + $0x200] sm:$0xf]
    %v819 = vld [vmem:[#allocation5 + $0x204] sm:$0xf]
    %v820 = vld [vmem:[#allocation7 + $0x6] sm:$0x1]
    %v821 = vlaneseq
    %v822 = vshrl.u32 %v821, 7
    %v823 = vsub.s32 0, %v822
    %v824 = vrot.slane %v820, %v823
    %v841 = vunpack.c.l.b16 %v804
    %v842 = vunpack.c.l.b16 %v805
    %v843 = vunpack.c.l.b16 %v806
    %v844 = vunpack.c.l.b16 %v807
    %v845 = vunpack.c.l.b16 %v808
    %v846 = vunpack.c.l.b16 %v809
    %v847 = vunpack.c.l.b16 %v810
    %v848 = vunpack.c.l.b16 %v811
    %v849 = vunpack.c.l.b16 %v812
    %v850 = vunpack.c.l.b16 %v813
    %v851 = vunpack.c.l.b16 %v814
    %v852 = vunpack.c.l.b16 %v815
    %v853 = vunpack.c.l.b16 %v816
    %v854 = vunpack.c.l.b16 %v817
    %v855 = vunpack.c.l.b16 %v818
    %v856 = vunpack.c.l.b16 %v819
    %v857 = vpack.c.b16 %v842, %v841
    %v858 = vpack.c.b16 %v844, %v843
    %v859 = vpack.c.b16 %v846, %v845
    %v860 = vpack.c.b16 %v848, %v847
    %v861 = vpack.c.b16 %v850, %v849
    %v862 = vpack.c.b16 %v852, %v851
    %v863 = vpack.c.b16 %v854, %v853
    %v864 = vpack.c.b16 %v856, %v855
    %873 = vmatprep.subr.bf16.mxu0 0
    %874 = vmatpush1.bf16.msra.mxu0 %v857
    %875 = vmatprep.subr.bf16.mxu0 0
    %876 = vmatpush1.bf16.msra.mxu0 %v858
    %877 = vmatprep.subr.bf16.mxu0 0
    %878 = vmatpush1.bf16.msra.mxu0 %v859
    %879 = vmatprep.subr.bf16.mxu0 0
    %880 = vmatpush1.bf16.msra.mxu0 %v860
    %881 = vmatprep.subr.bf16.mxu0 0
    %882 = vmatpush1.bf16.msra.mxu0 %v861
    %883 = vmatprep.subr.bf16.mxu0 0
    %884 = vmatpush1.bf16.msra.mxu0 %v862
    %885 = vmatprep.subr.bf16.mxu0 0
    %886 = vmatpush1.bf16.msra.mxu0 %v863
    %887 = vmatprep.subr.bf16.mxu0 0
    %888 = vmatpush1.bf16.msra.mxu0 %v864
    %889 = vmatprep.subr.bf16.mxu0 0
    %890 = vmatpush1.bf16.msra.mxu0 0
    %891 = vmatprep.subr.bf16.mxu0 0
    %892 = vmatpush1.bf16.msra.mxu0 0
    %893 = vmatprep.subr.bf16.mxu0 0
    %894 = vmatpush1.bf16.msra.mxu0 0
    %895 = vmatprep.subr.bf16.mxu0 0
    %896 = vmatpush1.bf16.msra.mxu0 0
    %897 = vmatprep.subr.bf16.mxu0 0
    %898 = vmatpush1.bf16.msra.mxu0 0
    %899 = vmatprep.subr.bf16.mxu0 0
    %900 = vmatpush1.bf16.msra.mxu0 0
    %901 = vmatprep.subr.bf16.mxu0 0
    %902 = vmatpush1.bf16.msra.mxu0 0
    %903 = vmatprep.subr.bf16.mxu0 0
    %904 = vmatpush1.bf16.msra.mxu0 0
    %905 = vmatprep.mubr.bf16.mxu0 0
    %906 = vmatmul.mubr.bf16.gmra.mrb[0].mxu0 %v803
    %v907 = vpop.f32.mrb[0].mxu0
    %v908 = vadd.f32 %v824, %v907
    %v909 = vpop.f32.mrb[0].mxu0
    %v910 = vpop.f32.mrb[0].mxu0
    %v911 = vpop.f32.mrb[0].mxu0
    %912 = vdwg.mxu0
    %913 = vst [vmem:[#allocation8] sm:$0xff] %v908
    // Predicated region
    $region26: #{tpu_custom_call.1} parent=1 // pred_check
      _
    $region27: #{tpu_custom_call.1} parent=1 // pred_check_branch
      %915 = sbr.rel (0) target = $region29
    $region28: #{tpu_custom_call.1} parent=1 // pred_region
      %s917 = ssub.s32 128, 128
      %918 = vsyncadd [#allocation4], %s917
      %s920 = sshll.u32 [#allocation8], 4
      %s921 = int_to_ptr.vmem [resolvable:$true] %s920
      %923 = dma.vmem_to_hbm [thread:$0]  %s921, 128, %s3, [#allocation4]
    $region29: #{tpu_custom_call.1} parent=1 // pred_fallthru
      _
    // Predicated region
    $region30: #{tpu_custom_call.1} parent=1 // pred_check
      _
    $region31: #{tpu_custom_call.1} parent=1 // pred_check_branch
      %925 = sbr.rel (0) target = $region33
    $region32: #{tpu_custom_call.1} parent=1 // pred_region
      %926 = dma.done [#allocation4], 128
    $region33: #{tpu_custom_call.1} parent=1 // pred_fallthru
      _
    %927 = vsyncpa [#allocation3], 1
    %928 = vsyncpa [#allocation6], 1
    %929 = vsyncpa [#allocation4], 1

</llo_original>
